<compile_context>
chip_gen: v7x
topology: tpu7x:2x2x1
jax: 0.10.0
libtpu: 0.0.40
codegen_flags: <defaults>
</compile_context>

<pallas_src>
import functools
import math

import jax
import jax.numpy as jnp
from jax.experimental import pallas as pl
from jax.experimental.pallas import tpu as pltpu

LANE = 128  # TPU lane width; all feature dims are padded to a multiple of this.


def _round_up(n, m):
    return ((n + m - 1) // m) * m


def _pad2(a, rows, cols):
    return jnp.pad(a, ((0, rows - a.shape[0]), (0, cols - a.shape[1])))


# ----------------------------- Pallas kernel --------------------------------
def fcn_kernel(m_ref,
               w1_ref, b1_ref,
               w2_ref, b2_ref,
               w3_ref, b3_ref,
               wh_ref, bh_ref,
               wv2_ref,
               o_ref,
               *, node_amount, matmul_dtype):
    """Whole-network forward on one (Bt, 128)-padded activation block."""

    def dense_relu(x_f32, w_ref, b_ref):
        # matmul operands may be bf16 (v6e/v7x); accumulate + bias + ReLU in f32 (VPU).
        y = jnp.dot(x_f32.astype(matmul_dtype), w_ref[...],
                    preferred_element_type=jnp.float32)
        return jnp.maximum(y + b_ref[...], 0.0)

    h = dense_relu(m_ref[...], w1_ref, b1_ref)     # (Bt, 2*MSp)
    h = dense_relu(h, w2_ref, b2_ref)              # (Bt, 2*MSp)
    h = dense_relu(h, w3_ref, b3_ref)              # (Bt, MSp), padded lanes are 0

    # merged heads: lanes [0,NA) = policy, [NA,NA+MS) = value hidden,
    # lane NA+MS = constant 1 (for folding lin_v2's bias), rest 0.
    heads = dense_relu(h, wh_ref, bh_ref)          # (Bt, OUT_LANES)

    # lin_v2 as a VPU multiply + lane reduce (bv2 folded via the constant-one lane),
    # instead of an N=1 MXU matmul.
    vx = jnp.sum(heads * wv2_ref[...], axis=-1, keepdims=True)   # (Bt, 1)

    # single lane-dense store: lanes [0,NA) = px, lane NA = vx, rest 0.
    lane = jax.lax.broadcasted_iota(jnp.int32, heads.shape, 1)
    out = jnp.where(lane < node_amount, heads, 0.0)
    out = jnp.where(lane == node_amount, vx, out)
    o_ref[...] = out


# ------------------------------- wrapper -------------------------------------
def fcn_forward(matrix, padded_params, *, node_amount,
                matmul_dtype=jnp.float32, batch_tile=None):
    """matrix: (B, MS) float32.  padded_params: output of pad_params()."""
    B, ms = matrix.shape
    k_pad = padded_params["w1"].shape[0]
    out_lanes = padded_params["wh"].shape[1]

    # zero-pad the input feature dim to the padded K of linear1 (layout plumbing).
    if ms < k_pad:
        matrix = jnp.pad(matrix, ((0, 0), (0, k_pad - ms)))

    args = (matrix,
            padded_params["w1"], padded_params["b1"],
            padded_params["w2"], padded_params["b2"],
            padded_params["w3"], padded_params["b3"],
            padded_params["wh"], padded_params["bh"],
            padded_params["wv2"])

    kernel = functools.partial(fcn_kernel, node_amount=node_amount,
                               matmul_dtype=matmul_dtype)
    out_shape = jax.ShapeDtypeStruct((B, out_lanes), jnp.float32)

    if batch_tile is None or batch_tile >= B:
        # Single invocation: no grid, no pipeline prologue/epilogue, everything in VMEM.
        vmem = pl.BlockSpec(memory_space=pltpu.MemorySpace.VMEM)
        out = pl.pallas_call(
            kernel,
            out_shape=out_shape,
            in_specs=[vmem] * len(args),
            out_specs=pl.BlockSpec(memory_space=pltpu.MemorySpace.VMEM),
        )(*args)
    else:
        # Batch-tiled path: stream activations, keep weights VMEM-resident
        # (constant index_map), batch axis "parallel" (sharded across TCs on v7x).
        assert B % batch_tile == 0, "batch must be divisible by batch_tile"
        act_map = lambda i: (i, 0)
        const_map = lambda i: (0, 0)
        in_specs = [pl.BlockSpec((batch_tile, k_pad), act_map)]
        in_specs += [pl.BlockSpec(a.shape, const_map) for a in args[1:]]
        out = pl.pallas_call(
            kernel,
            out_shape=out_shape,
            grid=(B // batch_tile,),
            in_specs=in_specs,
            out_specs=pl.BlockSpec((batch_tile, out_lanes), act_map),
            compiler_params=pltpu.CompilerParams(
                dimension_semantics=("parallel",)),
        )(*args)

    px = out[:, :node_amount]
    vx = out[:, node_amount:node_amount + 1]
    return px, vx


# -------------------------- parameter construction --------------------------
def init_linear(key, fan_in, fan_out):
    """PyTorch nn.Linear default init: U(-1/sqrt(fan_in), 1/sqrt(fan_in))."""
    kw, kb = jax.random.split(key)
    bound = 1.0 / math.sqrt(fan_in)
    w = jax.random.uniform(kw, (fan_in, fan_out), jnp.float32, -bound, bound)
    b = jax.random.uniform(kb, (1, fan_out), jnp.float32, -bound, bound)
    return w, b


def make_params(key, node_amount):
    ms = node_amount * node_amount          # adj_matrix=True, other info flags False
    keys = jax.random.split(key, 6)
    p = {}
    p["w1"], p["b1"] = init_linear(keys[0], ms, 2 * ms)          # linear1
    p["w2"], p["b2"] = init_linear(keys[1], 2 * ms, 2 * ms)      # linear2
    p["w3"], p["b3"] = init_linear(keys[2], 2 * ms, ms)          # linear3
    p["wp"], p["bp"] = init_linear(keys[3], ms, node_amount)     # linear_p2
    p["wv1"], p["bv1"] = init_linear(keys[4], ms, ms)            # lin_v1
    p["wv2"], p["bv2"] = init_linear(keys[5], ms, 1)             # lin_v2
    # TODO(synk): linear_p (the p_layers>1 branch) is dead code in the PyTorch
    # forward; it is not materialized.
    return p


def pad_params(p, node_amount, matmul_dtype=jnp.float32):
    """Pack / zero-pad raw parameters into 128-lane-dense kernel operands."""
    na = node_amount
    ms = p["wv1"].shape[0]
    hid = p["w1"].shape[1]                         # 2*ms
    msp = _round_up(ms, LANE)
    hidp = _round_up(hid, LANE)
    out_lanes = _round_up(na + ms + 1, LANE)       # policy | value-hidden | const-1 lane

    q = {}
    q["w1"] = _pad2(p["w1"], msp, hidp).astype(matmul_dtype)
    q["b1"] = _pad2(p["b1"], 1, hidp)
    q["w2"] = _pad2(p["w2"], hidp, hidp).astype(matmul_dtype)
    q["b2"] = _pad2(p["b2"], 1, hidp)
    q["w3"] = _pad2(p["w3"], hidp, msp).astype(matmul_dtype)
    q["b3"] = _pad2(p["b3"], 1, msp)

    # merged policy (linear_p2) + value-hidden (lin_v1) head, (MSp, out_lanes)
    head_w = jnp.zeros((msp, out_lanes), jnp.float32)
    head_w = head_w.at[:ms, :na].set(p["wp"])
    head_w = head_w.at[:ms, na:na + ms].set(p["wv1"])
    head_b = jnp.zeros((1, out_lanes), jnp.float32)
    head_b = head_b.at[:, :na].set(p["bp"])
    head_b = head_b.at[:, na:na + ms].set(p["bv1"])
    head_b = head_b.at[:, na + ms].set(1.0)        # constant-one lane (ReLU(0+1)=1)
    q["wh"] = head_w.astype(matmul_dtype)
    q["bh"] = head_b

    # lin_v2 as a lane vector for the VPU reduce; its bias rides on the const-1 lane.
    wv2 = jnp.zeros((1, out_lanes), jnp.float32)
    wv2 = wv2.at[:, na:na + ms].set(p["wv2"][:, 0])
    wv2 = wv2.at[:, na + ms].set(p["bv2"][0, 0])
    q["wv2"] = wv2
    return q


# ----------------------------- pure-JAX reference -----------------------------
def ref_forward(m, p):
    relu = lambda a: jnp.maximum(a, 0.0)
    h = relu(m @ p["w1"] + p["b1"])
    h = relu(h @ p["w2"] + p["b2"])
    h = relu(h @ p["w3"] + p["b3"])
    px = relu(h @ p["wp"] + p["bp"])
    v = relu(h @ p["wv1"] + p["bv1"])
    vx = v @ p["wv2"] + p["bv2"]
    return px, vx


# ---------------------------------- main -------------------------------------
if __name__ == "__main__":
    NODE_AMOUNT = 8                       # matrix_size = 64
    MS = NODE_AMOUNT * NODE_AMOUNT
    BATCH = 8

    root = jax.random.PRNGKey(0)
    k_params, k_in, k_in_big = jax.random.split(root, 3)
    params = make_params(k_params, NODE_AMOUNT)
    matrix = jax.random.normal(k_in, (BATCH, MS), dtype=jnp.float32)

    # 1) f32 path, single invocation (no grid).
    pp32 = pad_params(params, NODE_AMOUNT, matmul_dtype=jnp.float32)
    px, vx = fcn_forward(matrix, pp32, node_amount=NODE_AMOUNT)
    jax.block_until_ready((px, vx))
    px_r, vx_r = ref_forward(matrix, params)
    assert px.shape == (BATCH, NODE_AMOUNT) and vx.shape == (BATCH, 1)
    assert jnp.allclose(px, px_r, atol=1e-4, rtol=1e-4), "policy head mismatch (f32)"
    assert jnp.allclose(vx, vx_r, atol=1e-4, rtol=1e-4), "value head mismatch (f32)"

    # 2) batch-tiled path: weights resident across tiles, batch axis parallel.
    BIG = 256
    matrix_big = jax.random.normal(k_in_big, (BIG, MS), dtype=jnp.float32)
    px_b, vx_b = fcn_forward(matrix_big, pp32, node_amount=NODE_AMOUNT,
                             batch_tile=128)
    jax.block_until_ready((px_b, vx_b))
    px_br, vx_br = ref_forward(matrix_big, params)
    assert jnp.allclose(px_b, px_br, atol=1e-4, rtol=1e-4), "policy mismatch (tiled)"
    assert jnp.allclose(vx_b, vx_br, atol=1e-4, rtol=1e-4), "value mismatch (tiled)"

    # 3) bf16 weight / matmul path (v6e/v7x narrow format; bias+ReLU stay f32).
    pp16 = pad_params(params, NODE_AMOUNT, matmul_dtype=jnp.bfloat16)
    px16, vx16 = fcn_forward(matrix, pp16, node_amount=NODE_AMOUNT,
                             matmul_dtype=jnp.bfloat16)
    jax.block_until_ready((px16, vx16))
    assert jnp.allclose(px16, px_r, atol=5e-2, rtol=5e-2), "policy mismatch (bf16)"
    assert jnp.allclose(vx16, vx_r, atol=5e-2, rtol=5e-2), "value mismatch (bf16)"

    print("KERNEL_OK")
</pallas_src>

<mosaic_0001>
module attributes {stable_mosaic.version = 11 : i64} {
  func.func @fcn_kernel(%arg0: memref<8x128xf32, #tpu.memory_space<vmem>>, %arg1: memref<128x128xf32, #tpu.memory_space<vmem>>, %arg2: memref<1x128xf32, #tpu.memory_space<vmem>>, %arg3: memref<128x128xf32, #tpu.memory_space<vmem>>, %arg4: memref<1x128xf32, #tpu.memory_space<vmem>>, %arg5: memref<128x128xf32, #tpu.memory_space<vmem>>, %arg6: memref<1x128xf32, #tpu.memory_space<vmem>>, %arg7: memref<128x128xf32, #tpu.memory_space<vmem>>, %arg8: memref<1x128xf32, #tpu.memory_space<vmem>>, %arg9: memref<1x128xf32, #tpu.memory_space<vmem>>, %arg10: memref<8x128xf32, #tpu.memory_space<vmem>>) attributes {dimension_semantics = [], scalar_prefetch = 0 : i64, scratch_operands = 0 : i64, tpu.core_type = #tpu.core_type<tc>} {
    %c0 = arith.constant 0 : index
    %c0_0 = arith.constant 0 : index
    %0 = vector.load %arg0[%c0, %c0_0] : memref<8x128xf32, #tpu.memory_space<vmem>>, vector<8x128xf32>
    %c0_1 = arith.constant 0 : index
    %c0_2 = arith.constant 0 : index
    %1 = vector.load %arg1[%c0_1, %c0_2] : memref<128x128xf32, #tpu.memory_space<vmem>>, vector<128x128xf32>
    %cst = arith.constant dense<0.000000e+00> : vector<8x128xf32>
    %2 = tpu.matmul %0, %1, %cst {dimension_numbers = #tpu.dot_dimension_numbers<[1], [0], [0], [1], [0, 0, 1, 1], [], []>} : vector<8x128xf32>, vector<128x128xf32>, vector<8x128xf32> -> vector<8x128xf32>
    %c0_3 = arith.constant 0 : index
    %c0_4 = arith.constant 0 : index
    %3 = vector.load %arg2[%c0_3, %c0_4] : memref<1x128xf32, #tpu.memory_space<vmem>>, vector<1x128xf32>
    %4 = vector.broadcast %3 : vector<1x128xf32> to vector<8x128xf32>
    %5 = arith.addf %2, %4 : vector<8x128xf32>
    %cst_5 = arith.constant 0.000000e+00 : f32
    %6 = vector.broadcast %cst_5 : f32 to vector<8x128xf32>
    %7 = arith.maximumf %5, %6 : vector<8x128xf32>
    %c0_6 = arith.constant 0 : index
    %c0_7 = arith.constant 0 : index
    %8 = vector.load %arg3[%c0_6, %c0_7] : memref<128x128xf32, #tpu.memory_space<vmem>>, vector<128x128xf32>
    %cst_8 = arith.constant dense<0.000000e+00> : vector<8x128xf32>
    %9 = tpu.matmul %7, %8, %cst_8 {dimension_numbers = #tpu.dot_dimension_numbers<[1], [0], [0], [1], [0, 0, 1, 1], [], []>} : vector<8x128xf32>, vector<128x128xf32>, vector<8x128xf32> -> vector<8x128xf32>
    %c0_9 = arith.constant 0 : index
    %c0_10 = arith.constant 0 : index
    %10 = vector.load %arg4[%c0_9, %c0_10] : memref<1x128xf32, #tpu.memory_space<vmem>>, vector<1x128xf32>
    %11 = vector.broadcast %10 : vector<1x128xf32> to vector<8x128xf32>
    %12 = arith.addf %9, %11 : vector<8x128xf32>
    %cst_11 = arith.constant 0.000000e+00 : f32
    %13 = vector.broadcast %cst_11 : f32 to vector<8x128xf32>
    %14 = arith.maximumf %12, %13 : vector<8x128xf32>
    %c0_12 = arith.constant 0 : index
    %c0_13 = arith.constant 0 : index
    %15 = vector.load %arg5[%c0_12, %c0_13] : memref<128x128xf32, #tpu.memory_space<vmem>>, vector<128x128xf32>
    %cst_14 = arith.constant dense<0.000000e+00> : vector<8x128xf32>
    %16 = tpu.matmul %14, %15, %cst_14 {dimension_numbers = #tpu.dot_dimension_numbers<[1], [0], [0], [1], [0, 0, 1, 1], [], []>} : vector<8x128xf32>, vector<128x128xf32>, vector<8x128xf32> -> vector<8x128xf32>
    %c0_15 = arith.constant 0 : index
    %c0_16 = arith.constant 0 : index
    %17 = vector.load %arg6[%c0_15, %c0_16] : memref<1x128xf32, #tpu.memory_space<vmem>>, vector<1x128xf32>
    %18 = vector.broadcast %17 : vector<1x128xf32> to vector<8x128xf32>
    %19 = arith.addf %16, %18 : vector<8x128xf32>
    %cst_17 = arith.constant 0.000000e+00 : f32
    %20 = vector.broadcast %cst_17 : f32 to vector<8x128xf32>
    %21 = arith.maximumf %19, %20 : vector<8x128xf32>
    %c0_18 = arith.constant 0 : index
    %c0_19 = arith.constant 0 : index
    %22 = vector.load %arg7[%c0_18, %c0_19] : memref<128x128xf32, #tpu.memory_space<vmem>>, vector<128x128xf32>
    %cst_20 = arith.constant dense<0.000000e+00> : vector<8x128xf32>
    %23 = tpu.matmul %21, %22, %cst_20 {dimension_numbers = #tpu.dot_dimension_numbers<[1], [0], [0], [1], [0, 0, 1, 1], [], []>} : vector<8x128xf32>, vector<128x128xf32>, vector<8x128xf32> -> vector<8x128xf32>
    %c0_21 = arith.constant 0 : index
    %c0_22 = arith.constant 0 : index
    %24 = vector.load %arg8[%c0_21, %c0_22] : memref<1x128xf32, #tpu.memory_space<vmem>>, vector<1x128xf32>
    %25 = vector.broadcast %24 : vector<1x128xf32> to vector<8x128xf32>
    %26 = arith.addf %23, %25 : vector<8x128xf32>
    %cst_23 = arith.constant 0.000000e+00 : f32
    %27 = vector.broadcast %cst_23 : f32 to vector<8x128xf32>
    %28 = arith.maximumf %26, %27 : vector<8x128xf32>
    %c0_24 = arith.constant 0 : index
    %c0_25 = arith.constant 0 : index
    %29 = vector.load %arg9[%c0_24, %c0_25] : memref<1x128xf32, #tpu.memory_space<vmem>>, vector<1x128xf32>
    %30 = vector.broadcast %29 : vector<1x128xf32> to vector<8x128xf32>
    %31 = arith.mulf %28, %30 : vector<8x128xf32>
    %cst_26 = arith.constant dense<0.000000e+00> : vector<8xf32>
    %32 = vector.multi_reduction <add>, %31, %cst_26 [1] : vector<8x128xf32> to vector<8xf32>
    %33 = vector.shape_cast %32 : vector<8xf32> to vector<8x1xf32>
    %34 = tpu.iota {dimensions = array<i32: 1>} : vector<8x128xi32>
    %c8_i32 = arith.constant 8 : i32
    %35 = vector.broadcast %c8_i32 : i32 to vector<8x128xi32>
    %36 = arith.cmpi slt, %34, %35 : vector<8x128xi32>
    %cst_27 = arith.constant 0.000000e+00 : f32
    %37 = vector.broadcast %cst_27 : f32 to vector<8x128xf32>
    %38 = arith.select %36, %28, %37 : vector<8x128xi1>, vector<8x128xf32>
    %c8_i32_28 = arith.constant 8 : i32
    %39 = vector.broadcast %c8_i32_28 : i32 to vector<8x128xi32>
    %40 = arith.cmpi eq, %34, %39 : vector<8x128xi32>
    %41 = vector.shape_cast %33 : vector<8x1xf32> to vector<8x1xf32>
    %42 = vector.broadcast %41 : vector<8x1xf32> to vector<8x128xf32>
    %43 = arith.select %40, %42, %38 : vector<8x128xi1>, vector<8x128xf32>
    %c0_29 = arith.constant 0 : index
    %c0_30 = arith.constant 0 : index
    %44 = vector.load %arg10[%c0_29, %c0_30] : memref<8x128xf32, #tpu.memory_space<vmem>>, vector<8x128xf32>
    tpu.vector_store %arg10[%c0_29, %c0_30], %43 {strides = array<i32>} : memref<8x128xf32, #tpu.memory_space<vmem>>, vector<8x128xf32>,
    return
  }
}

</mosaic_0001>

<llo_original>
// kernel: tpu_custom_call.1
$region0: #{tpu_custom_call.1}
  #allocation0 [shape = 'u32[]', space=smem, size = 0x4, offset = 0x4, fixed_abs, tag = 'smem constant byte address 0x4 - core index']
  #allocation1 [shape = 'u32[144,128]{1,0:T(1,128)}', space=vmem, size = 0x12000, scoped, tag = 'internal scratch']
  %s0 = inlined_call_operand.hbm [shape: f32[8,128], index: 0, kind: input, shape index: {}]
  %s1 = inlined_call_operand.hbm [shape: f32[128,128], index: 1, kind: input, shape index: {}]
  %s2 = inlined_call_operand.vmem [shape: f32[1,128], index: 2, kind: input, shape index: {}]
  %s3 = inlined_call_operand.hbm [shape: f32[128,128], index: 3, kind: input, shape index: {}]
  %s4 = inlined_call_operand.vmem [shape: f32[1,128], index: 4, kind: input, shape index: {}]
  %s5 = inlined_call_operand.hbm [shape: f32[128,128], index: 5, kind: input, shape index: {}]
  %s6 = inlined_call_operand.vmem [shape: f32[1,128], index: 6, kind: input, shape index: {}]
  %s7 = inlined_call_operand.hbm [shape: f32[128,128], index: 7, kind: input, shape index: {}]
  %s8 = inlined_call_operand.vmem [shape: f32[1,128], index: 8, kind: input, shape index: {}]
  %s9 = inlined_call_operand.vmem [shape: f32[1,128], index: 9, kind: input, shape index: {}]
  %s10 = inlined_call_operand.hbm [shape: f32[8,128], index: 10, kind: output, shape index: {}]
  %s11 = sld [smem:[#allocation0]]
  $region70: #{tpu_custom_call.1} parent=0
    _
  %s13 = ssub.s32 1, %s11
  %s14 = scalar_select 0, %s13, %s11
  $region1: #{tpu_custom_call.1} parent=0
    #allocation2 [shape = 'u8[4096]{0}', space=vmem, size = 0x1000, scoped, tag = 'input window, operand 0, single buffered']
    #allocation3 [shape = 's32[1]{0}', space=sflag, size = 0x4, scoped, tag = 'scoped memory for tpu_custom_call.1']
    #allocation4 [shape = 's32[1]{0}', space=sflag, size = 0x4, scoped, tag = 'scoped memory for tpu_custom_call.1']
    #allocation5 [shape = 'u8[65536]{0}', space=vmem, size = 0x10000, scoped, tag = 'input window, operand 1, single buffered']
    #allocation6 [shape = 's32[1]{0}', space=sflag, size = 0x4, scoped, tag = 'scoped memory for tpu_custom_call.1']
    #allocation7 [shape = 'u8[65536]{0}', space=vmem, size = 0x10000, scoped, tag = 'input window, operand 3, single buffered']
    #allocation8 [shape = 'u8[65536]{0}', space=vmem, size = 0x10000, scoped, tag = 'input window, operand 5, single buffered']
    #allocation9 [shape = 's32[1]{0}', space=sflag, size = 0x4, scoped, tag = 'scoped memory for tpu_custom_call.1']
    #allocation10 [shape = 'u8[65536]{0}', space=vmem, size = 0x10000, scoped, tag = 'input window, operand 7, single buffered']
    #allocation11 [shape = 'u8[4096]{0}', space=vmem, size = 0x1000, scoped, tag = 'output window, operand 0, single buffered']
    %15 = vsyncpa [#allocation3], 0
    %16 = vsyncpa [#allocation6], 0
    %17 = vsyncpa [#allocation9], 0
    %18 = vsyncpa [#allocation4], 0
    // Predicated region
    $region2: #{tpu_custom_call.1} parent=1 // pred_check
      _
    $region3: #{tpu_custom_call.1} parent=1 // pred_check_branch
      %20 = sbr.rel (0) target = $region5
    $region4: #{tpu_custom_call.1} parent=1 // pred_region
      %s22 = ssub.s32 128, 128
      %23 = vsyncadd [#allocation3], %s22
      %s25 = sshll.u32 [#allocation2], 4
      %s26 = int_to_ptr.vmem [resolvable:$true] %s25
      %28 = dma.hbm_to_vmem [thread:$0]  %s0, 128, %s26, [#allocation3]
    $region5: #{tpu_custom_call.1} parent=1 // pred_fallthru
      _
    // Predicated region
    $region6: #{tpu_custom_call.1} parent=1 // pred_check
      _
    $region7: #{tpu_custom_call.1} parent=1 // pred_check_branch
      %30 = sbr.rel (0) target = $region9
    $region8: #{tpu_custom_call.1} parent=1 // pred_region
      %s32 = ssub.s32 2048, 2048
      %33 = vsyncadd [#allocation6], %s32
      %s34 = sshll.u32 [#allocation5], 4
      %s35 = int_to_ptr.vmem [resolvable:$true] %s34
      %40 = dma.hbm_to_vmem [thread:$0]  %s1, 2048, %s35, [#allocation6], 128, 128, 8
    $region9: #{tpu_custom_call.1} parent=1 // pred_fallthru
      _
    // Predicated region
    $region10: #{tpu_custom_call.1} parent=1 // pred_check
      _
    $region11: #{tpu_custom_call.1} parent=1 // pred_check_branch
      %42 = sbr.rel (0) target = $region13
    $region12: #{tpu_custom_call.1} parent=1 // pred_region
      _
    $region13: #{tpu_custom_call.1} parent=1 // pred_fallthru
      _
    // Predicated region
    $region14: #{tpu_custom_call.1} parent=1 // pred_check
      _
    $region15: #{tpu_custom_call.1} parent=1 // pred_check_branch
      %44 = sbr.rel (0) target = $region17
    $region16: #{tpu_custom_call.1} parent=1 // pred_region
      %s46 = ssub.s32 2048, 2048
      %47 = vsyncadd [#allocation6], %s46
      %s48 = sshll.u32 [#allocation7], 4
      %s49 = int_to_ptr.vmem [resolvable:$true] %s48
      %54 = dma.hbm_to_vmem [thread:$0]  %s3, 2048, %s49, [#allocation6], 128, 128, 8
    $region17: #{tpu_custom_call.1} parent=1 // pred_fallthru
      _
    // Predicated region
    $region18: #{tpu_custom_call.1} parent=1 // pred_check
      _
    $region19: #{tpu_custom_call.1} parent=1 // pred_check_branch
      %56 = sbr.rel (0) target = $region21
    $region20: #{tpu_custom_call.1} parent=1 // pred_region
      _
    $region21: #{tpu_custom_call.1} parent=1 // pred_fallthru
      _
    // Predicated region
    $region22: #{tpu_custom_call.1} parent=1 // pred_check
      _
    $region23: #{tpu_custom_call.1} parent=1 // pred_check_branch
      %58 = sbr.rel (0) target = $region25
    $region24: #{tpu_custom_call.1} parent=1 // pred_region
      %s60 = ssub.s32 2048, 2048
      %61 = vsyncadd [#allocation9], %s60
      %s62 = sshll.u32 [#allocation8], 4
      %s63 = int_to_ptr.vmem [resolvable:$true] %s62
      %68 = dma.hbm_to_vmem [thread:$0]  %s5, 2048, %s63, [#allocation9], 128, 128, 8
    $region25: #{tpu_custom_call.1} parent=1 // pred_fallthru
      _
    // Predicated region
    $region26: #{tpu_custom_call.1} parent=1 // pred_check
      _
    $region27: #{tpu_custom_call.1} parent=1 // pred_check_branch
      %70 = sbr.rel (0) target = $region29
    $region28: #{tpu_custom_call.1} parent=1 // pred_region
      _
    $region29: #{tpu_custom_call.1} parent=1 // pred_fallthru
      _
    // Predicated region
    $region30: #{tpu_custom_call.1} parent=1 // pred_check
      _
    $region31: #{tpu_custom_call.1} parent=1 // pred_check_branch
      %72 = sbr.rel (0) target = $region33
    $region32: #{tpu_custom_call.1} parent=1 // pred_region
      %s74 = ssub.s32 2048, 2048
      %75 = vsyncadd [#allocation9], %s74
      %s76 = sshll.u32 [#allocation10], 4
      %s77 = int_to_ptr.vmem [resolvable:$true] %s76
      %82 = dma.hbm_to_vmem [thread:$0]  %s7, 2048, %s77, [#allocation9], 128, 128, 8
    $region33: #{tpu_custom_call.1} parent=1 // pred_fallthru
      _
    // Predicated region
    $region34: #{tpu_custom_call.1} parent=1 // pred_check
      _
    $region35: #{tpu_custom_call.1} parent=1 // pred_check_branch
      %84 = sbr.rel (0) target = $region37
    $region36: #{tpu_custom_call.1} parent=1 // pred_region
      _
    $region37: #{tpu_custom_call.1} parent=1 // pred_fallthru
      _
    // Predicated region
    $region38: #{tpu_custom_call.1} parent=1 // pred_check
      _
    $region39: #{tpu_custom_call.1} parent=1 // pred_check_branch
      %86 = sbr.rel (0) target = $region41
    $region40: #{tpu_custom_call.1} parent=1 // pred_region
      _
    $region41: #{tpu_custom_call.1} parent=1 // pred_fallthru
      _
    // Predicated region
    $region42: #{tpu_custom_call.1} parent=1 // pred_check
      _
    $region43: #{tpu_custom_call.1} parent=1 // pred_check_branch
      %88 = sbr.rel (0) target = $region45
    $region44: #{tpu_custom_call.1} parent=1 // pred_region
      %89 = dma.done [#allocation3], 128
    $region45: #{tpu_custom_call.1} parent=1 // pred_fallthru
      _
    // Predicated region
    $region46: #{tpu_custom_call.1} parent=1 // pred_check
      _
    $region47: #{tpu_custom_call.1} parent=1 // pred_check_branch
      %91 = sbr.rel (0) target = $region49
    $region48: #{tpu_custom_call.1} parent=1 // pred_region
      %92 = dma.done [#allocation6], 2048
    $region49: #{tpu_custom_call.1} parent=1 // pred_fallthru
      _
    // Predicated region
    $region50: #{tpu_custom_call.1} parent=1 // pred_check
      _
    $region51: #{tpu_custom_call.1} parent=1 // pred_check_branch
      %94 = sbr.rel (0) target = $region53
    $region52: #{tpu_custom_call.1} parent=1 // pred_region
      %95 = dma.done [#allocation6], 2048
    $region53: #{tpu_custom_call.1} parent=1 // pred_fallthru
      _
    // Predicated region
    $region54: #{tpu_custom_call.1} parent=1 // pred_check
      _
    $region55: #{tpu_custom_call.1} parent=1 // pred_check_branch
      %97 = sbr.rel (0) target = $region57
    $region56: #{tpu_custom_call.1} parent=1 // pred_region
      %98 = dma.done [#allocation9], 2048
    $region57: #{tpu_custom_call.1} parent=1 // pred_fallthru
      _
    // Predicated region
    $region58: #{tpu_custom_call.1} parent=1 // pred_check
      _
    $region59: #{tpu_custom_call.1} parent=1 // pred_check_branch
      %100 = sbr.rel (0) target = $region61
    $region60: #{tpu_custom_call.1} parent=1 // pred_region
      %101 = dma.done [#allocation9], 2048
    $region61: #{tpu_custom_call.1} parent=1 // pred_fallthru
      _
    %v102 = vld [vmem:[#allocation2] sm:$0xff]
    %v103 = vld [vmem:[#allocation5] sm:$0xff]
    %v104 = vld [vmem:[#allocation5 + $0x8] sm:$0xff]
    %v105 = vld [vmem:[#allocation5 + $0x10] sm:$0xff]
    %v106 = vld [vmem:[#allocation5 + $0x18] sm:$0xff]
    %v107 = vld [vmem:[#allocation5 + $0x20] sm:$0xff]
    %v108 = vld [vmem:[#allocation5 + $0x28] sm:$0xff]
    %v109 = vld [vmem:[#allocation5 + $0x30] sm:$0xff]
    %v110 = vld [vmem:[#allocation5 + $0x38] sm:$0xff]
    %v111 = vld [vmem:[#allocation5 + $0x40] sm:$0xff]
    %v112 = vld [vmem:[#allocation5 + $0x48] sm:$0xff]
    %v113 = vld [vmem:[#allocation5 + $0x50] sm:$0xff]
    %v114 = vld [vmem:[#allocation5 + $0x58] sm:$0xff]
    %v115 = vld [vmem:[#allocation5 + $0x60] sm:$0xff]
    %v116 = vld [vmem:[#allocation5 + $0x68] sm:$0xff]
    %v117 = vld [vmem:[#allocation5 + $0x70] sm:$0xff]
    %v118 = vld [vmem:[#allocation5 + $0x78] sm:$0xff]
    %v119 = vld [vmem:[%s2] sm:$0x1]
    %v121 = vlaneseq
    %v122 = vshrl.u32 %v121, 7
    %v123 = vsub.s32 0, %v122
    %v124 = vrot.slane %v119, %v123
    %126 = vmatprep.subr.mxu0 0.0
    %127 = vmatpush1.msra.mxu0 %v103
    %128 = vmatprep.subr.mxu0 0.0
    %129 = vmatpush1.msra.mxu0 %v104
    %130 = vmatprep.subr.mxu0 0.0
    %131 = vmatpush1.msra.mxu0 %v105
    %132 = vmatprep.subr.mxu0 0.0
    %133 = vmatpush1.msra.mxu0 %v106
    %134 = vmatprep.subr.mxu0 0.0
    %135 = vmatpush1.msra.mxu0 %v107
    %136 = vmatprep.subr.mxu0 0.0
    %137 = vmatpush1.msra.mxu0 %v108
    %138 = vmatprep.subr.mxu0 0.0
    %139 = vmatpush1.msra.mxu0 %v109
    %140 = vmatprep.subr.mxu0 0.0
    %141 = vmatpush1.msra.mxu0 %v110
    %142 = vmatprep.subr.mxu0 0.0
    %143 = vmatpush1.msra.mxu0 %v111
    %144 = vmatprep.subr.mxu0 0.0
    %145 = vmatpush1.msra.mxu0 %v112
    %146 = vmatprep.subr.mxu0 0.0
    %147 = vmatpush1.msra.mxu0 %v113
    %148 = vmatprep.subr.mxu0 0.0
    %149 = vmatpush1.msra.mxu0 %v114
    %150 = vmatprep.subr.mxu0 0.0
    %151 = vmatpush1.msra.mxu0 %v115
    %152 = vmatprep.subr.mxu0 0.0
    %153 = vmatpush1.msra.mxu0 %v116
    %154 = vmatprep.subr.mxu0 0.0
    %155 = vmatpush1.msra.mxu0 %v117
    %156 = vmatprep.subr.mxu0 0.0
    %157 = vmatpush1.msra.mxu0 %v118
    %158 = vmatprep.subr.mxu0 0.0
    %159 = vmatpush1.msra.mxu0 0.0
    %160 = vmatprep.subr.mxu0 0.0
    %161 = vmatpush1.msra.mxu0 0.0
    %162 = vmatprep.subr.mxu0 0.0
    %163 = vmatpush1.msra.mxu0 0.0
    %164 = vmatprep.subr.mxu0 0.0
    %165 = vmatpush1.msra.mxu0 0.0
    %166 = vmatprep.subr.mxu0 0.0
    %167 = vmatpush1.msra.mxu0 0.0
    %168 = vmatprep.subr.mxu0 0.0
    %169 = vmatpush1.msra.mxu0 0.0
    %170 = vmatprep.subr.mxu0 0.0
    %171 = vmatpush1.msra.mxu0 0.0
    %172 = vmatprep.subr.mxu0 0.0
    %173 = vmatpush1.msra.mxu0 0.0
    %174 = vmatprep.subr.mxu0 0.0
    %175 = vmatpush1.msra.mxu0 0.0
    %176 = vmatprep.subr.mxu0 0.0
    %177 = vmatpush1.msra.mxu0 0.0
    %178 = vmatprep.subr.mxu0 0.0
    %179 = vmatpush1.msra.mxu0 0.0
    %180 = vmatprep.subr.mxu0 0.0
    %181 = vmatpush1.msra.mxu0 0.0
    %182 = vmatprep.subr.mxu0 0.0
    %183 = vmatpush1.msra.mxu0 0.0
    %184 = vmatprep.subr.mxu0 0.0
    %185 = vmatpush1.msra.mxu0 0.0
    %186 = vmatprep.subr.mxu0 0.0
    %187 = vmatpush1.msra.mxu0 0.0
    %188 = vmatprep.subr.mxu0 0.0
    %189 = vmatpush1.msra.mxu0 0.0
    %190 = vmatprep.mubr.f32.mxu0 0.0
    %191 = vmatmul.mubr.f32.gmra.mrb[0].mxu0 %v102
    %v192 = vpop.f32.mrb[0].mxu0
    %v193 = vadd.f32 %v124, %v192
    %v194 = vpop.f32.mrb[0].mxu0
    %195 = vdwg.mxu0
    %v196 = vmax.f32 %v193, 0.0
    %v197 = vld [vmem:[#allocation7] sm:$0xff]
    %v198 = vld [vmem:[#allocation7 + $0x8] sm:$0xff]
    %v199 = vld [vmem:[#allocation7 + $0x10] sm:$0xff]
    %v200 = vld [vmem:[#allocation7 + $0x18] sm:$0xff]
    %v201 = vld [vmem:[#allocation7 + $0x20] sm:$0xff]
    %v202 = vld [vmem:[#allocation7 + $0x28] sm:$0xff]
    %v203 = vld [vmem:[#allocation7 + $0x30] sm:$0xff]
    %v204 = vld [vmem:[#allocation7 + $0x38] sm:$0xff]
    %v205 = vld [vmem:[#allocation7 + $0x40] sm:$0xff]
    %v206 = vld [vmem:[#allocation7 + $0x48] sm:$0xff]
    %v207 = vld [vmem:[#allocation7 + $0x50] sm:$0xff]
    %v208 = vld [vmem:[#allocation7 + $0x58] sm:$0xff]
    %v209 = vld [vmem:[#allocation7 + $0x60] sm:$0xff]
    %v210 = vld [vmem:[#allocation7 + $0x68] sm:$0xff]
    %v211 = vld [vmem:[#allocation7 + $0x70] sm:$0xff]
    %v212 = vld [vmem:[#allocation7 + $0x78] sm:$0xff]
    %v213 = vld [vmem:[%s4] sm:$0x1]
    %v215 = vlaneseq
    %v216 = vshrl.u32 %v215, 7
    %v217 = vsub.s32 0, %v216
    %v218 = vrot.slane %v213, %v217
    %220 = vmatprep.subr.mxu0 0.0
    %221 = vmatpush1.msra.mxu0 %v197
    %222 = vmatprep.subr.mxu0 0.0
    %223 = vmatpush1.msra.mxu0 %v198
    %224 = vmatprep.subr.mxu0 0.0
    %225 = vmatpush1.msra.mxu0 %v199
    %226 = vmatprep.subr.mxu0 0.0
    %227 = vmatpush1.msra.mxu0 %v200
    %228 = vmatprep.subr.mxu0 0.0
    %229 = vmatpush1.msra.mxu0 %v201
    %230 = vmatprep.subr.mxu0 0.0
    %231 = vmatpush1.msra.mxu0 %v202
    %232 = vmatprep.subr.mxu0 0.0
    %233 = vmatpush1.msra.mxu0 %v203
    %234 = vmatprep.subr.mxu0 0.0
    %235 = vmatpush1.msra.mxu0 %v204
    %236 = vmatprep.subr.mxu0 0.0
    %237 = vmatpush1.msra.mxu0 %v205
    %238 = vmatprep.subr.mxu0 0.0
    %239 = vmatpush1.msra.mxu0 %v206
    %240 = vmatprep.subr.mxu0 0.0
    %241 = vmatpush1.msra.mxu0 %v207
    %242 = vmatprep.subr.mxu0 0.0
    %243 = vmatpush1.msra.mxu0 %v208
    %244 = vmatprep.subr.mxu0 0.0
    %245 = vmatpush1.msra.mxu0 %v209
    %246 = vmatprep.subr.mxu0 0.0
    %247 = vmatpush1.msra.mxu0 %v210
    %248 = vmatprep.subr.mxu0 0.0
    %249 = vmatpush1.msra.mxu0 %v211
    %250 = vmatprep.subr.mxu0 0.0
    %251 = vmatpush1.msra.mxu0 %v212
    %252 = vmatprep.subr.mxu0 0.0
    %253 = vmatpush1.msra.mxu0 0.0
    %254 = vmatprep.subr.mxu0 0.0
    %255 = vmatpush1.msra.mxu0 0.0
    %256 = vmatprep.subr.mxu0 0.0
    %257 = vmatpush1.msra.mxu0 0.0
    %258 = vmatprep.subr.mxu0 0.0
    %259 = vmatpush1.msra.mxu0 0.0
    %260 = vmatprep.subr.mxu0 0.0
    %261 = vmatpush1.msra.mxu0 0.0
    %262 = vmatprep.subr.mxu0 0.0
    %263 = vmatpush1.msra.mxu0 0.0
    %264 = vmatprep.subr.mxu0 0.0
    %265 = vmatpush1.msra.mxu0 0.0
    %266 = vmatprep.subr.mxu0 0.0
    %267 = vmatpush1.msra.mxu0 0.0
    %268 = vmatprep.subr.mxu0 0.0
    %269 = vmatpush1.msra.mxu0 0.0
    %270 = vmatprep.subr.mxu0 0.0
    %271 = vmatpush1.msra.mxu0 0.0
    %272 = vmatprep.subr.mxu0 0.0
    %273 = vmatpush1.msra.mxu0 0.0
    %274 = vmatprep.subr.mxu0 0.0
    %275 = vmatpush1.msra.mxu0 0.0
    %276 = vmatprep.subr.mxu0 0.0
    %277 = vmatpush1.msra.mxu0 0.0
    %278 = vmatprep.subr.mxu0 0.0
    %279 = vmatpush1.msra.mxu0 0.0
    %280 = vmatprep.subr.mxu0 0.0
    %281 = vmatpush1.msra.mxu0 0.0
    %282 = vmatprep.subr.mxu0 0.0
    %283 = vmatpush1.msra.mxu0 0.0
    %284 = vmatprep.mubr.f32.mxu0 0.0
    %285 = vmatmul.mubr.f32.gmra.mrb[0].mxu0 %v196
    %v286 = vpop.f32.mrb[0].mxu0
    %v287 = vadd.f32 %v218, %v286
    %v288 = vpop.f32.mrb[0].mxu0
    %289 = vdwg.mxu0
    %v290 = vmax.f32 %v287, 0.0
    %v291 = vld [vmem:[#allocation8] sm:$0xff]
    %v292 = vld [vmem:[#allocation8 + $0x8] sm:$0xff]
    %v293 = vld [vmem:[#allocation8 + $0x10] sm:$0xff]
    %v294 = vld [vmem:[#allocation8 + $0x18] sm:$0xff]
    %v295 = vld [vmem:[#allocation8 + $0x20] sm:$0xff]
    %v296 = vld [vmem:[#allocation8 + $0x28] sm:$0xff]
    %v297 = vld [vmem:[#allocation8 + $0x30] sm:$0xff]
    %v298 = vld [vmem:[#allocation8 + $0x38] sm:$0xff]
    %v299 = vld [vmem:[#allocation8 + $0x40] sm:$0xff]
    %v300 = vld [vmem:[#allocation8 + $0x48] sm:$0xff]
    %v301 = vld [vmem:[#allocation8 + $0x50] sm:$0xff]
    %v302 = vld [vmem:[#allocation8 + $0x58] sm:$0xff]
    %v303 = vld [vmem:[#allocation8 + $0x60] sm:$0xff]
    %v304 = vld [vmem:[#allocation8 + $0x68] sm:$0xff]
    %v305 = vld [vmem:[#allocation8 + $0x70] sm:$0xff]
    %v306 = vld [vmem:[#allocation8 + $0x78] sm:$0xff]
    %v307 = vld [vmem:[%s6] sm:$0x1]
    %v309 = vlaneseq
    %v310 = vshrl.u32 %v309, 7
    %v311 = vsub.s32 0, %v310
    %v312 = vrot.slane %v307, %v311
    %314 = vmatprep.subr.mxu0 0.0
    %315 = vmatpush1.msra.mxu0 %v291
    %316 = vmatprep.subr.mxu0 0.0
    %317 = vmatpush1.msra.mxu0 %v292
    %318 = vmatprep.subr.mxu0 0.0
    %319 = vmatpush1.msra.mxu0 %v293
    %320 = vmatprep.subr.mxu0 0.0
    %321 = vmatpush1.msra.mxu0 %v294
    %322 = vmatprep.subr.mxu0 0.0
    %323 = vmatpush1.msra.mxu0 %v295
    %324 = vmatprep.subr.mxu0 0.0
    %325 = vmatpush1.msra.mxu0 %v296
    %326 = vmatprep.subr.mxu0 0.0
    %327 = vmatpush1.msra.mxu0 %v297
    %328 = vmatprep.subr.mxu0 0.0
    %329 = vmatpush1.msra.mxu0 %v298
    %330 = vmatprep.subr.mxu0 0.0
    %331 = vmatpush1.msra.mxu0 %v299
    %332 = vmatprep.subr.mxu0 0.0
    %333 = vmatpush1.msra.mxu0 %v300
    %334 = vmatprep.subr.mxu0 0.0
    %335 = vmatpush1.msra.mxu0 %v301
    %336 = vmatprep.subr.mxu0 0.0
    %337 = vmatpush1.msra.mxu0 %v302
    %338 = vmatprep.subr.mxu0 0.0
    %339 = vmatpush1.msra.mxu0 %v303
    %340 = vmatprep.subr.mxu0 0.0
    %341 = vmatpush1.msra.mxu0 %v304
    %342 = vmatprep.subr.mxu0 0.0
    %343 = vmatpush1.msra.mxu0 %v305
    %344 = vmatprep.subr.mxu0 0.0
    %345 = vmatpush1.msra.mxu0 %v306
    %346 = vmatprep.subr.mxu0 0.0
    %347 = vmatpush1.msra.mxu0 0.0
    %348 = vmatprep.subr.mxu0 0.0
    %349 = vmatpush1.msra.mxu0 0.0
    %350 = vmatprep.subr.mxu0 0.0
    %351 = vmatpush1.msra.mxu0 0.0
    %352 = vmatprep.subr.mxu0 0.0
    %353 = vmatpush1.msra.mxu0 0.0
    %354 = vmatprep.subr.mxu0 0.0
    %355 = vmatpush1.msra.mxu0 0.0
    %356 = vmatprep.subr.mxu0 0.0
    %357 = vmatpush1.msra.mxu0 0.0
    %358 = vmatprep.subr.mxu0 0.0
    %359 = vmatpush1.msra.mxu0 0.0
    %360 = vmatprep.subr.mxu0 0.0
    %361 = vmatpush1.msra.mxu0 0.0
    %362 = vmatprep.subr.mxu0 0.0
    %363 = vmatpush1.msra.mxu0 0.0
    %364 = vmatprep.subr.mxu0 0.0
    %365 = vmatpush1.msra.mxu0 0.0
    %366 = vmatprep.subr.mxu0 0.0
    %367 = vmatpush1.msra.mxu0 0.0
    %368 = vmatprep.subr.mxu0 0.0
    %369 = vmatpush1.msra.mxu0 0.0
    %370 = vmatprep.subr.mxu0 0.0
    %371 = vmatpush1.msra.mxu0 0.0
    %372 = vmatprep.subr.mxu0 0.0
    %373 = vmatpush1.msra.mxu0 0.0
    %374 = vmatprep.subr.mxu0 0.0
    %375 = vmatpush1.msra.mxu0 0.0
    %376 = vmatprep.subr.mxu0 0.0
    %377 = vmatpush1.msra.mxu0 0.0
    %378 = vmatprep.mubr.f32.mxu0 0.0
    %379 = vmatmul.mubr.f32.gmra.mrb[0].mxu0 %v290
    %v380 = vpop.f32.mrb[0].mxu0
    %v381 = vadd.f32 %v312, %v380
    %v382 = vpop.f32.mrb[0].mxu0
    %383 = vdwg.mxu0
    %v384 = vmax.f32 %v381, 0.0
    %v385 = vld [vmem:[#allocation10] sm:$0xff]
    %v386 = vld [vmem:[#allocation10 + $0x8] sm:$0xff]
    %v387 = vld [vmem:[#allocation10 + $0x10] sm:$0xff]
    %v388 = vld [vmem:[#allocation10 + $0x18] sm:$0xff]
    %v389 = vld [vmem:[#allocation10 + $0x20] sm:$0xff]
    %v390 = vld [vmem:[#allocation10 + $0x28] sm:$0xff]
    %v391 = vld [vmem:[#allocation10 + $0x30] sm:$0xff]
    %v392 = vld [vmem:[#allocation10 + $0x38] sm:$0xff]
    %v393 = vld [vmem:[#allocation10 + $0x40] sm:$0xff]
    %v394 = vld [vmem:[#allocation10 + $0x48] sm:$0xff]
    %v395 = vld [vmem:[#allocation10 + $0x50] sm:$0xff]
    %v396 = vld [vmem:[#allocation10 + $0x58] sm:$0xff]
    %v397 = vld [vmem:[#allocation10 + $0x60] sm:$0xff]
    %v398 = vld [vmem:[#allocation10 + $0x68] sm:$0xff]
    %v399 = vld [vmem:[#allocation10 + $0x70] sm:$0xff]
    %v400 = vld [vmem:[#allocation10 + $0x78] sm:$0xff]
    %v401 = vld [vmem:[%s8] sm:$0x1]
    %v403 = vlaneseq
    %v404 = vshrl.u32 %v403, 7
    %v405 = vsub.s32 0, %v404
    %v406 = vrot.slane %v401, %v405
    %408 = vmatprep.subr.mxu0 0.0
    %409 = vmatpush1.msra.mxu0 %v385
    %410 = vmatprep.subr.mxu0 0.0
    %411 = vmatpush1.msra.mxu0 %v386
    %412 = vmatprep.subr.mxu0 0.0
    %413 = vmatpush1.msra.mxu0 %v387
    %414 = vmatprep.subr.mxu0 0.0
    %415 = vmatpush1.msra.mxu0 %v388
    %416 = vmatprep.subr.mxu0 0.0
    %417 = vmatpush1.msra.mxu0 %v389
    %418 = vmatprep.subr.mxu0 0.0
    %419 = vmatpush1.msra.mxu0 %v390
    %420 = vmatprep.subr.mxu0 0.0
    %421 = vmatpush1.msra.mxu0 %v391
    %422 = vmatprep.subr.mxu0 0.0
    %423 = vmatpush1.msra.mxu0 %v392
    %424 = vmatprep.subr.mxu0 0.0
    %425 = vmatpush1.msra.mxu0 %v393
    %426 = vmatprep.subr.mxu0 0.0
    %427 = vmatpush1.msra.mxu0 %v394
    %428 = vmatprep.subr.mxu0 0.0
    %429 = vmatpush1.msra.mxu0 %v395
    %430 = vmatprep.subr.mxu0 0.0
    %431 = vmatpush1.msra.mxu0 %v396
    %432 = vmatprep.subr.mxu0 0.0
    %433 = vmatpush1.msra.mxu0 %v397
    %434 = vmatprep.subr.mxu0 0.0
    %435 = vmatpush1.msra.mxu0 %v398
    %436 = vmatprep.subr.mxu0 0.0
    %437 = vmatpush1.msra.mxu0 %v399
    %438 = vmatprep.subr.mxu0 0.0
    %439 = vmatpush1.msra.mxu0 %v400
    %440 = vmatprep.subr.mxu0 0.0
    %441 = vmatpush1.msra.mxu0 0.0
    %442 = vmatprep.subr.mxu0 0.0
    %443 = vmatpush1.msra.mxu0 0.0
    %444 = vmatprep.subr.mxu0 0.0
    %445 = vmatpush1.msra.mxu0 0.0
    %446 = vmatprep.subr.mxu0 0.0
    %447 = vmatpush1.msra.mxu0 0.0
    %448 = vmatprep.subr.mxu0 0.0
    %449 = vmatpush1.msra.mxu0 0.0
    %450 = vmatprep.subr.mxu0 0.0
    %451 = vmatpush1.msra.mxu0 0.0
    %452 = vmatprep.subr.mxu0 0.0
    %453 = vmatpush1.msra.mxu0 0.0
    %454 = vmatprep.subr.mxu0 0.0
    %455 = vmatpush1.msra.mxu0 0.0
    %456 = vmatprep.subr.mxu0 0.0
    %457 = vmatpush1.msra.mxu0 0.0
    %458 = vmatprep.subr.mxu0 0.0
    %459 = vmatpush1.msra.mxu0 0.0
    %460 = vmatprep.subr.mxu0 0.0
    %461 = vmatpush1.msra.mxu0 0.0
    %462 = vmatprep.subr.mxu0 0.0
    %463 = vmatpush1.msra.mxu0 0.0
    %464 = vmatprep.subr.mxu0 0.0
    %465 = vmatpush1.msra.mxu0 0.0
    %466 = vmatprep.subr.mxu0 0.0
    %467 = vmatpush1.msra.mxu0 0.0
    %468 = vmatprep.subr.mxu0 0.0
    %469 = vmatpush1.msra.mxu0 0.0
    %470 = vmatprep.subr.mxu0 0.0
    %471 = vmatpush1.msra.mxu0 0.0
    %472 = vmatprep.mubr.f32.mxu0 0.0
    %473 = vmatmul.mubr.f32.gmra.mrb[0].mxu0 %v384
    %v474 = vpop.f32.mrb[0].mxu0
    %v475 = vadd.f32 %v406, %v474
    %v476 = vpop.f32.mrb[0].mxu0
    %477 = vdwg.mxu0
    %v478 = vmax.f32 %v475, 0.0
    %v479 = vld [vmem:[%s9] sm:$0x1]
    %v481 = vlaneseq
    %v482 = vshrl.u32 %v481, 7
    %v483 = vsub.s32 0, %v482
    %v484 = vrot.slane %v479, %v483
    %v486 = vmul.f32 %v478, %v484
    %487 = vadd.xlane.f32.xlu0 %v486
    %v488 = vpop.xlane.xlu0 %487
    %v489 = vlaneseq
    %v490 = vand.u32 %v489, 127
    %vm491 = vcmp.lt.s32.totalorder %v490, 8
    %v492 = vsel %vm491, %v478, 0.0
    %vm493 = vcmp.eq.s32.totalorder %v490, 8
    %v494 = vsel %vm493, %v488, %v492
    %495 = vst [vmem:[#allocation11] sm:$0xff] %v494
    // Predicated region
    $region62: #{tpu_custom_call.1} parent=1 // pred_check
      _
    $region63: #{tpu_custom_call.1} parent=1 // pred_check_branch
      %497 = sbr.rel (0) target = $region65
    $region64: #{tpu_custom_call.1} parent=1 // pred_region
      %s499 = ssub.s32 128, 128
      %500 = vsyncadd [#allocation4], %s499
      %s502 = sshll.u32 [#allocation11], 4
      %s503 = int_to_ptr.vmem [resolvable:$true] %s502
      %505 = dma.vmem_to_hbm [thread:$0]  %s503, 128, %s10, [#allocation4]
    $region65: #{tpu_custom_call.1} parent=1 // pred_fallthru
      _
    // Predicated region
    $region66: #{tpu_custom_call.1} parent=1 // pred_check
      _
    $region67: #{tpu_custom_call.1} parent=1 // pred_check_branch
      %507 = sbr.rel (0) target = $region69
    $region68: #{tpu_custom_call.1} parent=1 // pred_region
      %508 = dma.done [#allocation4], 128
    $region69: #{tpu_custom_call.1} parent=1 // pred_fallthru
      _
    %509 = vsyncpa [#allocation3], 1
    %510 = vsyncpa [#allocation6], 1
    %511 = vsyncpa [#allocation9], 1
    %512 = vsyncpa [#allocation4], 1

</llo_original>
